<compile_context>
chip_gen: v6e
topology: v6e:2x2x1
jax: 0.10.0
libtpu: 0.0.40
codegen_flags: <defaults>
</compile_context>

<pallas_src>
import jax
import jax.numpy as jnp
from jax.experimental import pallas as pl
from jax.experimental.pallas import tpu as pltpu


def _pick_batch_block(n, s, d):
    """Batch elements per grid step.

    Aim for NB*S >= 256 rows (fills the MXU M dimension on v6e/v7x; v5e only
    needs 128), NB a multiple of 8 so the (NB, D) output store is
    sublane-dense, and keep the per-step f32 working set (scores NB*S*S plus
    ~4 activation tiles of NB*S*D, double-buffered) comfortably under the
    scoped-VMEM default on every generation (v7x has only 64 MiB physical).
    """
    nb = -(-256 // s)                      # cdiv(256, S)
    nb = ((nb + 7) // 8) * 8               # multiple of 8
    budget = 4 << 20                       # ~4 MiB per-step working set
    while nb > 8 and nb * s * (s + 4 * d) * 4 > budget:
        nb = max(8, ((nb // 2 + 7) // 8) * 8)
    if n <= nb:
        return n                           # single grid step, block == full batch
    return nb


def _attention_block(h, wt_in, wt_om, wt_oq, apply_tanh):
    """One Attention layer on a (NB, S, D) block.  Weights are pre-transposed."""
    nb, s, d = h.shape
    h2 = h.reshape(nb * s, d)
    # linear_in: one big (NB*S, D) x (D, D) matmul (MXU M-dim filled).
    q2 = jnp.dot(h2, wt_in, preferred_element_type=jnp.float32)          # (NB*S, D)
    q = q2.reshape(nb, s, d)
    # Attention scores: contract the feature axis directly (no h.T materialized).
    scores = jnp.einsum('bqd,bkd->bqk', q, h,
                        preferred_element_type=jnp.float32)              # (NB, S, S)
    m = jnp.max(scores, axis=-1, keepdims=True)
    p = jnp.exp(scores - m)
    denom = jnp.sum(p, axis=-1, keepdims=True)
    attn = p * pl.reciprocal(denom, approx=False)   # exact: keeps 1e-5 tolerance
    mix = jnp.einsum('bqk,bkd->bqd', attn, h,
                     preferred_element_type=jnp.float32)                 # (NB, S, D)
    # linear_out on concat([mix, q]) == mix @ Wom^T + q @ Woq^T (pre-transposed).
    out2 = (jnp.dot(mix.reshape(nb * s, d), wt_om,
                    preferred_element_type=jnp.float32)
            + jnp.dot(q2, wt_oq, preferred_element_type=jnp.float32))    # (NB*S, D)
    out = out2.reshape(nb, s, d)
    if apply_tanh:
        out = jnp.tanh(out)
    return out


def fuser_kernel(x_ref, w_ref, o_ref):
    x = x_ref[...]                                       # (NB, S, D)
    # w_ref: (6, D, D) stacked, already transposed:
    #   [0] W1_in^T  [1] W1_out_mix^T  [2] W1_out_q^T
    #   [3] W2_in^T  [4] W2_out_mix^T  [5] W2_out_q^T
    h = _attention_block(x, w_ref[0], w_ref[1], w_ref[2],
                         apply_tanh=True)    # attention_1: ignore_tanh=False
    h = _attention_block(h, w_ref[3], w_ref[4], w_ref[5],
                         apply_tanh=False)   # attention_2: ignore_tanh=True
    # avg_pool1d over the full sequence length == mean over S.
    o_ref[...] = jnp.mean(h, axis=1)                     # (NB, D) dense store


def attention_fuser_v2(x, params):
    """x: (N, S, D) float32.  Returns (N, D, 1, 1)."""
    N, S, D = x.shape
    w1_in, w1_out, w2_in, w2_out = params

    # Split each linear_out weight (D, 2D) into mix / query halves and
    # pre-transpose everything once (no `.T` inside the kernel); stack into a
    # single (6, D, D) input -> one grid-invariant BlockSpec / DMA.
    w1_om, w1_oq = w1_out[:, :D], w1_out[:, D:]
    w2_om, w2_oq = w2_out[:, :D], w2_out[:, D:]
    w_stack = jnp.stack([w1_in.T, w1_om.T, w1_oq.T,
                         w2_in.T, w2_om.T, w2_oq.T], axis=0)             # (6, D, D)

    NB = _pick_batch_block(N, S, D)
    n_pad = ((N + NB - 1) // NB) * NB
    xp = x if n_pad == N else jnp.pad(x, ((0, n_pad - N), (0, 0), (0, 0)))

    out = pl.pallas_call(
        fuser_kernel,
        out_shape=jax.ShapeDtypeStruct((n_pad, D), jnp.float32),
        grid=(n_pad // NB,),
        in_specs=[
            pl.BlockSpec((NB, S, D), lambda n: (n, 0, 0)),   # batch block of x
            pl.BlockSpec((6, D, D), lambda n: (0, 0, 0)),    # all weights, once
        ],
        out_specs=pl.BlockSpec((NB, D), lambda n: (n, 0)),   # dense pooled tile
        compiler_params=pltpu.CompilerParams(
            dimension_semantics=("parallel",)),               # megacore on v7x
    )(xp, w_stack)

    return out[:N].reshape(N, D, 1, 1)


def attention_fuser_v2_ref(x, params):
    """Pure-JAX reference mirroring the PyTorch forward."""
    w1_in, w1_out, w2_in, w2_out = params

    def attn(h, w_in, w_out, ignore_tanh):
        q = h @ w_in.T
        scores = jnp.einsum('nqd,nkd->nqk', q, h)
        w = jax.nn.softmax(scores, axis=-1)
        mix = jnp.einsum('nqk,nkd->nqd', w, h)
        combined = jnp.concatenate([mix, q], axis=-1)
        out = combined @ w_out.T
        if not ignore_tanh:
            out = jnp.tanh(out)
        return out

    h = attn(x, w1_in, w1_out, ignore_tanh=False)
    h = attn(h, w2_in, w2_out, ignore_tanh=True)
    pooled = jnp.mean(h, axis=1)                      # avg_pool1d over full length
    return pooled.reshape(x.shape[0], -1, 1, 1)


def init_params(key, dimensions):
    """Deterministic init of the two Attention layers' bias-free Linears."""
    D = dimensions
    k1, k2, k3, k4 = jax.random.split(key, 4)
    s_in = 1.0 / jnp.sqrt(D)
    s_out = 1.0 / jnp.sqrt(2.0 * D)
    w1_in = jax.random.uniform(k1, (D, D), jnp.float32, -s_in, s_in)
    w1_out = jax.random.uniform(k2, (D, 2 * D), jnp.float32, -s_out, s_out)
    w2_in = jax.random.uniform(k3, (D, D), jnp.float32, -s_in, s_in)
    w2_out = jax.random.uniform(k4, (D, 2 * D), jnp.float32, -s_out, s_out)
    return (w1_in, w1_out, w2_in, w2_out)


if __name__ == "__main__":
    N, S, D = 2, 8, 32  # batch, seq_len, dimensions
    key = jax.random.PRNGKey(0)
    kx, kp = jax.random.split(key)
    x = jax.random.normal(kx, (N, S, D), dtype=jnp.float32)
    params = init_params(kp, D)

    out = jax.block_until_ready(attention_fuser_v2(x, params))
    ref = jax.block_until_ready(attention_fuser_v2_ref(x, params))
    assert out.shape == (N, D, 1, 1), out.shape
    assert jnp.allclose(out, ref, atol=1e-5, rtol=1e-5), (
        float(jnp.max(jnp.abs(out - ref))))

    # Also exercise the multi-block / padded-batch path (grid > 1).
    N2 = 40
    x2 = jax.random.normal(jax.random.PRNGKey(1), (N2, S, D), dtype=jnp.float32)
    out2 = jax.block_until_ready(attention_fuser_v2(x2, params))
    ref2 = jax.block_until_ready(attention_fuser_v2_ref(x2, params))
    assert out2.shape == (N2, D, 1, 1), out2.shape
    assert jnp.allclose(out2, ref2, atol=1e-5, rtol=1e-5), (
        float(jnp.max(jnp.abs(out2 - ref2))))

    print("KERNEL_OK")
</pallas_src>

<mosaic_0001>
module attributes {stable_mosaic.version = 11 : i64} {
  func.func @fuser_kernel(%arg0: i32, %arg1: memref<2x8x32xf32, #tpu.memory_space<vmem>>, %arg2: memref<6x32x32xf32, #tpu.memory_space<vmem>>, %arg3: memref<2x32xf32, #tpu.memory_space<vmem>>) attributes {dimension_semantics = [#tpu.dimension_semantics<parallel>], iteration_bounds = array<i64: 1>, scalar_prefetch = 0 : i64, scratch_operands = 0 : i64, tpu.core_type = #tpu.core_type<tc>, window_params = [{transform_indices = @transform_0, window_bounds = array<i64: 2, 8, 32>}, {pipeline_mode = #tpu.pipeline_mode<synchronous>, transform_indices = @transform_1, window_bounds = array<i64: 6, 32, 32>}, {transform_indices = @transform_2, window_bounds = array<i64: 2, 32>}]} {
    %c0 = arith.constant 0 : index
    %c0_0 = arith.constant 0 : index
    %c0_1 = arith.constant 0 : index
    %0 = vector.load %arg1[%c0, %c0_0, %c0_1] : memref<2x8x32xf32, #tpu.memory_space<vmem>>, vector<2x8x32xf32>
    %c0_2 = arith.constant 0 : index
    %c0_3 = arith.constant 0 : index
    %c0_4 = arith.constant 0 : index
    %1 = vector.load %arg2[%c0_2, %c0_3, %c0_4] : memref<6x32x32xf32, #tpu.memory_space<vmem>>, vector<1x32x32xf32>
    %2 = vector.shape_cast %1 : vector<1x32x32xf32> to vector<32x32xf32>
    %c1 = arith.constant 1 : index
    %c0_5 = arith.constant 0 : index
    %c0_6 = arith.constant 0 : index
    %3 = vector.load %arg2[%c1, %c0_5, %c0_6] : memref<6x32x32xf32, #tpu.memory_space<vmem>>, vector<1x32x32xf32>
    %4 = vector.shape_cast %3 : vector<1x32x32xf32> to vector<32x32xf32>
    %c2 = arith.constant 2 : index
    %c0_7 = arith.constant 0 : index
    %c0_8 = arith.constant 0 : index
    %5 = vector.load %arg2[%c2, %c0_7, %c0_8] : memref<6x32x32xf32, #tpu.memory_space<vmem>>, vector<1x32x32xf32>
    %6 = vector.shape_cast %5 : vector<1x32x32xf32> to vector<32x32xf32>
    %7 = vector.shape_cast %0 : vector<2x8x32xf32> to vector<16x32xf32>
    %cst = arith.constant dense<0.000000e+00> : vector<16x32xf32>
    %8 = tpu.matmul %7, %2, %cst {dimension_numbers = #tpu.dot_dimension_numbers<[1], [0], [0], [1], [0, 0, 1, 1], [], []>} : vector<16x32xf32>, vector<32x32xf32>, vector<16x32xf32> -> vector<16x32xf32>
    %9 = vector.shape_cast %8 : vector<16x32xf32> to vector<2x8x32xf32>
    "tpu.trace_start"() <{level = 10 : i32, message = "bqd,bkd->bqk"}> : () -> ()
    %cst_9 = arith.constant dense<0.000000e+00> : vector<2x8x8xf32>
    %10 = tpu.matmul %9, %0, %cst_9 {dimension_numbers = #tpu.dot_dimension_numbers<[2], [2], [1], [1], [0, 0, 0, 1, 1, 1], [0], [0]>} : vector<2x8x32xf32>, vector<2x8x32xf32>, vector<2x8x8xf32> -> vector<2x8x8xf32>
    "tpu.trace_stop"() : () -> ()
    %cst_10 = arith.constant dense<0xFF800000> : vector<2x8xf32>
    %11 = vector.multi_reduction <maximumf>, %10, %cst_10 [2] : vector<2x8x8xf32> to vector<2x8xf32>
    %12 = vector.shape_cast %11 : vector<2x8xf32> to vector<2x8x1xf32>
    %13 = vector.broadcast %12 : vector<2x8x1xf32> to vector<2x8x8xf32>
    %14 = arith.subf %10, %13 : vector<2x8x8xf32>
    %15 = math.exp %14 : vector<2x8x8xf32>
    %cst_11 = arith.constant dense<0.000000e+00> : vector<2x8xf32>
    %16 = vector.multi_reduction <add>, %15, %cst_11 [2] : vector<2x8x8xf32> to vector<2x8xf32>
    %17 = vector.shape_cast %16 : vector<2x8xf32> to vector<2x8x1xf32>
    %18 = tpu.reciprocal %17 : vector<2x8x1xf32> -> vector<2x8x1xf32>
    %19 = vector.broadcast %18 : vector<2x8x1xf32> to vector<2x8x8xf32>
    %20 = arith.mulf %15, %19 : vector<2x8x8xf32>
    "tpu.trace_start"() <{level = 10 : i32, message = "bqk,bkd->bqd"}> : () -> ()
    %cst_12 = arith.constant dense<0.000000e+00> : vector<2x8x32xf32>
    %21 = tpu.matmul %20, %0, %cst_12 {dimension_numbers = #tpu.dot_dimension_numbers<[2], [1], [1], [2], [0, 0, 0, 1, 1, 2], [0], [0]>} : vector<2x8x8xf32>, vector<2x8x32xf32>, vector<2x8x32xf32> -> vector<2x8x32xf32>
    "tpu.trace_stop"() : () -> ()
    %22 = vector.shape_cast %21 : vector<2x8x32xf32> to vector<16x32xf32>
    %cst_13 = arith.constant dense<0.000000e+00> : vector<16x32xf32>
    %23 = tpu.matmul %22, %4, %cst_13 {dimension_numbers = #tpu.dot_dimension_numbers<[1], [0], [0], [1], [0, 0, 1, 1], [], []>} : vector<16x32xf32>, vector<32x32xf32>, vector<16x32xf32> -> vector<16x32xf32>
    %cst_14 = arith.constant dense<0.000000e+00> : vector<16x32xf32>
    %24 = tpu.matmul %8, %6, %cst_14 {dimension_numbers = #tpu.dot_dimension_numbers<[1], [0], [0], [1], [0, 0, 1, 1], [], []>} : vector<16x32xf32>, vector<32x32xf32>, vector<16x32xf32> -> vector<16x32xf32>
    %25 = arith.addf %23, %24 : vector<16x32xf32>
    %26 = vector.shape_cast %25 : vector<16x32xf32> to vector<2x8x32xf32>
    %27 = math.tanh %26 : vector<2x8x32xf32>
    %c3 = arith.constant 3 : index
    %c0_15 = arith.constant 0 : index
    %c0_16 = arith.constant 0 : index
    %28 = vector.load %arg2[%c3, %c0_15, %c0_16] : memref<6x32x32xf32, #tpu.memory_space<vmem>>, vector<1x32x32xf32>
    %29 = vector.shape_cast %28 : vector<1x32x32xf32> to vector<32x32xf32>
    %c4 = arith.constant 4 : index
    %c0_17 = arith.constant 0 : index
    %c0_18 = arith.constant 0 : index
    %30 = vector.load %arg2[%c4, %c0_17, %c0_18] : memref<6x32x32xf32, #tpu.memory_space<vmem>>, vector<1x32x32xf32>
    %31 = vector.shape_cast %30 : vector<1x32x32xf32> to vector<32x32xf32>
    %c5 = arith.constant 5 : index
    %c0_19 = arith.constant 0 : index
    %c0_20 = arith.constant 0 : index
    %32 = vector.load %arg2[%c5, %c0_19, %c0_20] : memref<6x32x32xf32, #tpu.memory_space<vmem>>, vector<1x32x32xf32>
    %33 = vector.shape_cast %32 : vector<1x32x32xf32> to vector<32x32xf32>
    %34 = vector.shape_cast %27 : vector<2x8x32xf32> to vector<16x32xf32>
    %cst_21 = arith.constant dense<0.000000e+00> : vector<16x32xf32>
    %35 = tpu.matmul %34, %29, %cst_21 {dimension_numbers = #tpu.dot_dimension_numbers<[1], [0], [0], [1], [0, 0, 1, 1], [], []>} : vector<16x32xf32>, vector<32x32xf32>, vector<16x32xf32> -> vector<16x32xf32>
    %36 = vector.shape_cast %35 : vector<16x32xf32> to vector<2x8x32xf32>
    "tpu.trace_start"() <{level = 10 : i32, message = "bqd,bkd->bqk"}> : () -> ()
    %cst_22 = arith.constant dense<0.000000e+00> : vector<2x8x8xf32>
    %37 = tpu.matmul %36, %27, %cst_22 {dimension_numbers = #tpu.dot_dimension_numbers<[2], [2], [1], [1], [0, 0, 0, 1, 1, 1], [0], [0]>} : vector<2x8x32xf32>, vector<2x8x32xf32>, vector<2x8x8xf32> -> vector<2x8x8xf32>
    "tpu.trace_stop"() : () -> ()
    %cst_23 = arith.constant dense<0xFF800000> : vector<2x8xf32>
    %38 = vector.multi_reduction <maximumf>, %37, %cst_23 [2] : vector<2x8x8xf32> to vector<2x8xf32>
    %39 = vector.shape_cast %38 : vector<2x8xf32> to vector<2x8x1xf32>
    %40 = vector.broadcast %39 : vector<2x8x1xf32> to vector<2x8x8xf32>
    %41 = arith.subf %37, %40 : vector<2x8x8xf32>
    %42 = math.exp %41 : vector<2x8x8xf32>
    %cst_24 = arith.constant dense<0.000000e+00> : vector<2x8xf32>
    %43 = vector.multi_reduction <add>, %42, %cst_24 [2] : vector<2x8x8xf32> to vector<2x8xf32>
    %44 = vector.shape_cast %43 : vector<2x8xf32> to vector<2x8x1xf32>
    %45 = tpu.reciprocal %44 : vector<2x8x1xf32> -> vector<2x8x1xf32>
    %46 = vector.broadcast %45 : vector<2x8x1xf32> to vector<2x8x8xf32>
    %47 = arith.mulf %42, %46 : vector<2x8x8xf32>
    "tpu.trace_start"() <{level = 10 : i32, message = "bqk,bkd->bqd"}> : () -> ()
    %cst_25 = arith.constant dense<0.000000e+00> : vector<2x8x32xf32>
    %48 = tpu.matmul %47, %27, %cst_25 {dimension_numbers = #tpu.dot_dimension_numbers<[2], [1], [1], [2], [0, 0, 0, 1, 1, 2], [0], [0]>} : vector<2x8x8xf32>, vector<2x8x32xf32>, vector<2x8x32xf32> -> vector<2x8x32xf32>
    "tpu.trace_stop"() : () -> ()
    %49 = vector.shape_cast %48 : vector<2x8x32xf32> to vector<16x32xf32>
    %cst_26 = arith.constant dense<0.000000e+00> : vector<16x32xf32>
    %50 = tpu.matmul %49, %31, %cst_26 {dimension_numbers = #tpu.dot_dimension_numbers<[1], [0], [0], [1], [0, 0, 1, 1], [], []>} : vector<16x32xf32>, vector<32x32xf32>, vector<16x32xf32> -> vector<16x32xf32>
    %cst_27 = arith.constant dense<0.000000e+00> : vector<16x32xf32>
    %51 = tpu.matmul %35, %33, %cst_27 {dimension_numbers = #tpu.dot_dimension_numbers<[1], [0], [0], [1], [0, 0, 1, 1], [], []>} : vector<16x32xf32>, vector<32x32xf32>, vector<16x32xf32> -> vector<16x32xf32>
    %52 = arith.addf %50, %51 : vector<16x32xf32>
    %53 = vector.shape_cast %52 : vector<16x32xf32> to vector<2x8x32xf32>
    %cst_28 = arith.constant dense<0.000000e+00> : vector<2x32xf32>
    %54 = vector.multi_reduction <add>, %53, %cst_28 [1] : vector<2x8x32xf32> to vector<2x32xf32>
    %cst_29 = arith.constant 8.000000e+00 : f32
    %55 = vector.broadcast %cst_29 : f32 to vector<2x32xf32>
    %56 = arith.divf %54, %55 : vector<2x32xf32>
    %c0_30 = arith.constant 0 : index
    %c0_31 = arith.constant 0 : index
    %57 = vector.load %arg3[%c0_30, %c0_31] : memref<2x32xf32, #tpu.memory_space<vmem>>, vector<2x32xf32>
    tpu.vector_store %arg3[%c0_30, %c0_31], %56 {strides = array<i32>} : memref<2x32xf32, #tpu.memory_space<vmem>>, vector<2x32xf32>,
    return
  }
  func.func @transform_0(%arg0: i32) -> (i32, i32, i32) {
    %c0_i32 = arith.constant 0 : i32
    %c0_i32_0 = arith.constant 0 : i32
    %c0_i32_1 = arith.constant 0 : i32
    return %arg0, %c0_i32, %c0_i32_0 : i32, i32, i32
  }
  func.func @transform_1(%arg0: i32) -> (i32, i32, i32) {
    %c0_i32 = arith.constant 0 : i32
    %c0_i32_0 = arith.constant 0 : i32
    %c0_i32_1 = arith.constant 0 : i32
    %c0_i32_2 = arith.constant 0 : i32
    return %c0_i32, %c0_i32_0, %c0_i32_1 : i32, i32, i32
  }
  func.func @transform_2(%arg0: i32) -> (i32, i32) {
    %c0_i32 = arith.constant 0 : i32
    %c0_i32_0 = arith.constant 0 : i32
    return %arg0, %c0_i32 : i32, i32
  }
}

</mosaic_0001>

<llo_original>
// kernel: tpu_custom_call.1
$region0: #{tpu_custom_call.1}
  #allocation0 [shape = 'u32[]', space=smem, size = 0x4, offset = 0x4, fixed_abs, tag = 'smem constant byte address 0x4 - core index']
  #allocation1 [shape = 'u32[144,128]{1,0:T(1,128)}', space=vmem, size = 0x12000, scoped, tag = 'internal scratch']
  %s0 = inlined_call_operand.hbm [shape: f32[2,8,32], index: 0, kind: input, shape index: {}]
  %s1 = inlined_call_operand.hbm [shape: f32[6,32,32], index: 1, kind: input, shape index: {}]
  %s2 = inlined_call_operand.hbm [shape: f32[2,32], index: 2, kind: output, shape index: {}]
  %s3 = sld [smem:[#allocation0]]
  $region26: #{tpu_custom_call.1} parent=0
    _
  %s5 = ssub.s32 1, %s3
  %s6 = scalar_select 0, %s5, %s3
  $region1: #{tpu_custom_call.1} parent=0
    #allocation2 [shape = 'u8[8192]{0}', space=vmem, size = 0x2000, scoped, tag = 'input window, operand 0, single buffered']
    #allocation3 [shape = 's32[1]{0}', space=sflag, size = 0x4, scoped, tag = 'scoped memory for tpu_custom_call.1']
    #allocation4 [shape = 's32[1]{0}', space=sflag, size = 0x4, scoped, tag = 'scoped memory for tpu_custom_call.1']
    #allocation5 [shape = 'u8[98304]{0}', space=vmem, size = 0x18000, scoped, tag = 'input window, operand 1, single buffered']
    #allocation6 [shape = 's32[1]{0}', space=sflag, size = 0x4, scoped, tag = 'scoped memory for tpu_custom_call.1']
    #allocation7 [shape = 'u8[1024]{0}', space=vmem, size = 0x400, scoped, tag = 'output window, operand 0, single buffered']
    %7 = vsyncpa [#allocation3], 0
    %8 = vsyncpa [#allocation6], 0
    %9 = vsyncpa [#allocation4], 0
    // Predicated region
    $region2: #{tpu_custom_call.1} parent=1 // pred_check
      _
    $region3: #{tpu_custom_call.1} parent=1 // pred_check_branch
      %11 = sbr.rel (0) target = $region5
    $region4: #{tpu_custom_call.1} parent=1 // pred_region
      %s13 = ssub.s32 256, 256
      %14 = vsyncadd [#allocation3], %s13
      %s15 = sshll.u32 [#allocation2], 4
      %s16 = int_to_ptr.vmem [resolvable:$true] %s15
      %21 = dma.hbm_to_vmem [thread:$0]  %s0, 256, %s16, [#allocation3], 128, 128, 8
    $region5: #{tpu_custom_call.1} parent=1 // pred_fallthru
      _
    // Predicated region
    $region6: #{tpu_custom_call.1} parent=1 // pred_check
      _
    $region7: #{tpu_custom_call.1} parent=1 // pred_check_branch
      %23 = sbr.rel (0) target = $region9
    $region8: #{tpu_custom_call.1} parent=1 // pred_region
      %s25 = ssub.s32 3072, 3072
      %26 = vsyncadd [#allocation6], %s25
      %s27 = sshll.u32 [#allocation5], 4
      %s28 = int_to_ptr.vmem [resolvable:$true] %s27
      %33 = dma.hbm_to_vmem [thread:$0]  %s1, 3072, %s28, [#allocation6], 128, 128, 8
    $region9: #{tpu_custom_call.1} parent=1 // pred_fallthru
      _
    // Predicated region
    $region10: #{tpu_custom_call.1} parent=1 // pred_check
      _
    $region11: #{tpu_custom_call.1} parent=1 // pred_check_branch
      %35 = sbr.rel (0) target = $region13
    $region12: #{tpu_custom_call.1} parent=1 // pred_region
      %36 = dma.done [#allocation3], 256
    $region13: #{tpu_custom_call.1} parent=1 // pred_fallthru
      _
    // Predicated region
    $region14: #{tpu_custom_call.1} parent=1 // pred_check
      _
    $region15: #{tpu_custom_call.1} parent=1 // pred_check_branch
      %38 = sbr.rel (0) target = $region17
    $region16: #{tpu_custom_call.1} parent=1 // pred_region
      %39 = dma.done [#allocation6], 3072
    $region17: #{tpu_custom_call.1} parent=1 // pred_fallthru
      _
    %v40 = vld [vmem:[#allocation2] sm:$0xff]
    %v41 = vld [vmem:[#allocation2 + $0x8] sm:$0xff]
    %v42 = vld [vmem:[#allocation5] sm:$0xff]
    %v43 = vld [vmem:[#allocation5 + $0x8] sm:$0xff]
    %v44 = vld [vmem:[#allocation5 + $0x10] sm:$0xff]
    %v45 = vld [vmem:[#allocation5 + $0x18] sm:$0xff]
    %s46 = scalar_lea.vmem [#allocation5], 32
    %v47 = vld [vmem:[%s46] sm:$0xff]
    %v48 = vld [vmem:[%s46 + $0x8] sm:$0xff]
    %v49 = vld [vmem:[%s46 + $0x10] sm:$0xff]
    %v50 = vld [vmem:[%s46 + $0x18] sm:$0xff]
    %s51 = scalar_lea.vmem [#allocation5], 64
    %v52 = vld [vmem:[%s51] sm:$0xff]
    %v53 = vld [vmem:[%s51 + $0x8] sm:$0xff]
    %v54 = vld [vmem:[%s51 + $0x10] sm:$0xff]
    %v55 = vld [vmem:[%s51 + $0x18] sm:$0xff]
    %vm56 = vcmask 261120
    %v58 = vsel %vm56, %v40, 0
    %v61 = vsel %vm56, %v41, 0
    %63 = vmatprep.subr.mxu0 0.0
    %64 = vmatpush1.msra.mxu0 0.0
    %65 = vmatprep.subr.mxu0 0.0
    %66 = vmatpush1.msra.mxu0 0.0
    %67 = vmatprep.subr.mxu0 0.0
    %68 = vmatpush1.msra.mxu0 0.0
    %69 = vmatprep.subr.mxu0 0.0
    %70 = vmatpush1.msra.mxu0 0.0
    %71 = vmatprep.subr.mxu0 0.0
    %72 = vmatpush1.msra.mxu0 0.0
    %73 = vmatprep.subr.mxu0 0.0
    %74 = vmatpush1.msra.mxu0 0.0
    %75 = vmatprep.subr.mxu0 0.0
    %76 = vmatpush1.msra.mxu0 0.0
    %77 = vmatprep.subr.mxu0 0.0
    %78 = vmatpush1.msra.mxu0 0.0
    %79 = vmatprep.subr.mxu0 0.0
    %80 = vmatpush1.msra.mxu0 0.0
    %81 = vmatprep.subr.mxu0 0.0
    %82 = vmatpush1.msra.mxu0 0.0
    %83 = vmatprep.subr.mxu0 0.0
    %84 = vmatpush1.msra.mxu0 0.0
    %85 = vmatprep.subr.mxu0 0.0
    %86 = vmatpush1.msra.mxu0 0.0
    %87 = vmatprep.subr.mxu0 0.0
    %88 = vmatpush1.msra.mxu0 %v45
    %89 = vmatprep.subr.mxu0 0.0
    %90 = vmatpush1.msra.mxu0 %v44
    %91 = vmatprep.subr.mxu0 0.0
    %92 = vmatpush1.msra.mxu0 %v43
    %93 = vmatprep.subr.mxu0 0.0
    %94 = vmatpush1.msra.mxu0 %v42
    %95 = vmatprep.subr.mxu0 0.0
    %96 = vmatpush2.msra.mxu0 0.0
    %97 = vmatprep.subr.mxu0 0.0
    %98 = vmatpush2.msra.mxu0 0.0
    %99 = vmatprep.subr.mxu0 0.0
    %100 = vmatpush2.msra.mxu0 0.0
    %101 = vmatprep.subr.mxu0 0.0
    %102 = vmatpush2.msra.mxu0 0.0
    %103 = vmatprep.subr.mxu0 0.0
    %104 = vmatpush2.msra.mxu0 0.0
    %105 = vmatprep.subr.mxu0 0.0
    %106 = vmatpush2.msra.mxu0 0.0
    %107 = vmatprep.subr.mxu0 0.0
    %108 = vmatpush2.msra.mxu0 0.0
    %109 = vmatprep.subr.mxu0 0.0
    %110 = vmatpush2.msra.mxu0 0.0
    %111 = vmatprep.subr.mxu0 0.0
    %112 = vmatpush2.msra.mxu0 0.0
    %113 = vmatprep.subr.mxu0 0.0
    %114 = vmatpush2.msra.mxu0 0.0
    %115 = vmatprep.subr.mxu0 0.0
    %116 = vmatpush2.msra.mxu0 0.0
    %117 = vmatprep.subr.mxu0 0.0
    %118 = vmatpush2.msra.mxu0 0.0
    %119 = vmatprep.subr.mxu0 0.0
    %120 = vmatpush2.msra.mxu0 0.0
    %121 = vmatprep.subr.mxu0 0.0
    %122 = vmatpush2.msra.mxu0 0.0
    %123 = vmatprep.subr.mxu0 0.0
    %124 = vmatpush2.msra.mxu0 0.0
    %125 = vmatprep.subr.mxu0 0.0
    %126 = vmatpush2.msra.mxu0 0.0
    %127 = vmatprep.mubr.f32.mxu0 0.0
    %128 = vmatmul.mubr.f32.gmra.mxu0 %v58
    %v129 = vpop.f32.mrf.mxu0
    %v130 = vadd.f32 0.0, %v129
    %v131 = vpop.f32.mrf.mxu0
    %132 = vmatprep.mubr.f32.mxu0 0.0
    %133 = vmatmul.mubr.f32.gmra.mxu0 %v61
    %v134 = vpop.f32.mrf.mxu0
    %v135 = vadd.f32 0.0, %v134
    %v136 = vpop.f32.mrf.mxu0
    %137 = vdwg.mxu0
    %v139 = vsel %vm56, %v130, 0
    %141 = vmatprep.subr.mxu0 0.0
    %142 = vmatpush1.xpose.msra.mxu0 0.0
    %143 = vmatprep.subr.mxu0 0.0
    %144 = vmatpush1.xpose.msra.mxu0 0.0
    %145 = vmatprep.subr.mxu0 0.0
    %146 = vmatpush1.xpose.msra.mxu0 0.0
    %147 = vmatprep.subr.mxu0 0.0
    %148 = vmatpush1.xpose.msra.mxu0 0.0
    %149 = vmatprep.subr.mxu0 0.0
    %150 = vmatpush1.xpose.msra.mxu0 0.0
    %151 = vmatprep.subr.mxu0 0.0
    %152 = vmatpush1.xpose.msra.mxu0 0.0
    %153 = vmatprep.subr.mxu0 0.0
    %154 = vmatpush1.xpose.msra.mxu0 0.0
    %155 = vmatprep.subr.mxu0 0.0
    %156 = vmatpush1.xpose.msra.mxu0 0.0
    %157 = vmatprep.subr.mxu0 0.0
    %158 = vmatpush1.xpose.msra.mxu0 0.0
    %159 = vmatprep.subr.mxu0 0.0
    %160 = vmatpush1.xpose.msra.mxu0 0.0
    %161 = vmatprep.subr.mxu0 0.0
    %162 = vmatpush1.xpose.msra.mxu0 0.0
    %163 = vmatprep.subr.mxu0 0.0
    %164 = vmatpush1.xpose.msra.mxu0 0.0
    %165 = vmatprep.subr.mxu0 0.0
    %166 = vmatpush1.xpose.msra.mxu0 0.0
    %167 = vmatprep.subr.mxu0 0.0
    %168 = vmatpush1.xpose.msra.mxu0 0.0
    %169 = vmatprep.subr.mxu0 0.0
    %170 = vmatpush1.xpose.msra.mxu0 0.0
    %171 = vmatprep.subr.mxu0 0.0
    %172 = vmatpush1.xpose.msra.mxu0 %v58
    %173 = vmatprep.subr.mxu0 0.0
    %174 = vmatpush2.xpose.msra.mxu0 0.0
    %175 = vmatprep.subr.mxu0 0.0
    %176 = vmatpush2.xpose.msra.mxu0 0.0
    %177 = vmatprep.subr.mxu0 0.0
    %178 = vmatpush2.xpose.msra.mxu0 0.0
    %179 = vmatprep.subr.mxu0 0.0
    %180 = vmatpush2.xpose.msra.mxu0 0.0
    %181 = vmatprep.subr.mxu0 0.0
    %182 = vmatpush2.xpose.msra.mxu0 0.0
    %183 = vmatprep.subr.mxu0 0.0
    %184 = vmatpush2.xpose.msra.mxu0 0.0
    %185 = vmatprep.subr.mxu0 0.0
    %186 = vmatpush2.xpose.msra.mxu0 0.0
    %187 = vmatprep.subr.mxu0 0.0
    %188 = vmatpush2.xpose.msra.mxu0 0.0
    %189 = vmatprep.subr.mxu0 0.0
    %190 = vmatpush2.xpose.msra.mxu0 0.0
    %191 = vmatprep.subr.mxu0 0.0
    %192 = vmatpush2.xpose.msra.mxu0 0.0
    %193 = vmatprep.subr.mxu0 0.0
    %194 = vmatpush2.xpose.msra.mxu0 0.0
    %195 = vmatprep.subr.mxu0 0.0
    %196 = vmatpush2.xpose.msra.mxu0 0.0
    %197 = vmatprep.subr.mxu0 0.0
    %198 = vmatpush2.xpose.msra.mxu0 0.0
    %199 = vmatprep.subr.mxu0 0.0
    %200 = vmatpush2.xpose.msra.mxu0 0.0
    %201 = vmatprep.subr.mxu0 0.0
    %202 = vmatpush2.xpose.msra.mxu0 0.0
    %203 = vmatprep.subr.mxu0 0.0
    %204 = vmatpush2.xpose.msra.mxu0 0.0
    %205 = vmatprep.mubr.f32.mxu0 0.0
    %206 = vmatmul.mubr.f32.gmra.mxu0 %v139
    %v207 = vpop.f32.mrf.mxu0
    %v208 = vadd.f32 0.0, %v207
    %v209 = vpop.f32.mrf.mxu0
    %210 = vdwg.mxu0
    %v212 = vsel %vm56, %v135, 0
    %214 = vmatprep.subr.mxu0 0.0
    %215 = vmatpush1.xpose.msra.mxu0 0.0
    %216 = vmatprep.subr.mxu0 0.0
    %217 = vmatpush1.xpose.msra.mxu0 0.0
    %218 = vmatprep.subr.mxu0 0.0
    %219 = vmatpush1.xpose.msra.mxu0 0.0
    %220 = vmatprep.subr.mxu0 0.0
    %221 = vmatpush1.xpose.msra.mxu0 0.0
    %222 = vmatprep.subr.mxu0 0.0
    %223 = vmatpush1.xpose.msra.mxu0 0.0
    %224 = vmatprep.subr.mxu0 0.0
    %225 = vmatpush1.xpose.msra.mxu0 0.0
    %226 = vmatprep.subr.mxu0 0.0
    %227 = vmatpush1.xpose.msra.mxu0 0.0
    %228 = vmatprep.subr.mxu0 0.0
    %229 = vmatpush1.xpose.msra.mxu0 0.0
    %230 = vmatprep.subr.mxu0 0.0
    %231 = vmatpush1.xpose.msra.mxu0 0.0
    %232 = vmatprep.subr.mxu0 0.0
    %233 = vmatpush1.xpose.msra.mxu0 0.0
    %234 = vmatprep.subr.mxu0 0.0
    %235 = vmatpush1.xpose.msra.mxu0 0.0
    %236 = vmatprep.subr.mxu0 0.0
    %237 = vmatpush1.xpose.msra.mxu0 0.0
    %238 = vmatprep.subr.mxu0 0.0
    %239 = vmatpush1.xpose.msra.mxu0 0.0
    %240 = vmatprep.subr.mxu0 0.0
    %241 = vmatpush1.xpose.msra.mxu0 0.0
    %242 = vmatprep.subr.mxu0 0.0
    %243 = vmatpush1.xpose.msra.mxu0 0.0
    %244 = vmatprep.subr.mxu0 0.0
    %245 = vmatpush1.xpose.msra.mxu0 %v61
    %246 = vmatprep.subr.mxu0 0.0
    %247 = vmatpush2.xpose.msra.mxu0 0.0
    %248 = vmatprep.subr.mxu0 0.0
    %249 = vmatpush2.xpose.msra.mxu0 0.0
    %250 = vmatprep.subr.mxu0 0.0
    %251 = vmatpush2.xpose.msra.mxu0 0.0
    %252 = vmatprep.subr.mxu0 0.0
    %253 = vmatpush2.xpose.msra.mxu0 0.0
    %254 = vmatprep.subr.mxu0 0.0
    %255 = vmatpush2.xpose.msra.mxu0 0.0
    %256 = vmatprep.subr.mxu0 0.0
    %257 = vmatpush2.xpose.msra.mxu0 0.0
    %258 = vmatprep.subr.mxu0 0.0
    %259 = vmatpush2.xpose.msra.mxu0 0.0
    %260 = vmatprep.subr.mxu0 0.0
    %261 = vmatpush2.xpose.msra.mxu0 0.0
    %262 = vmatprep.subr.mxu0 0.0
    %263 = vmatpush2.xpose.msra.mxu0 0.0
    %264 = vmatprep.subr.mxu0 0.0
    %265 = vmatpush2.xpose.msra.mxu0 0.0
    %266 = vmatprep.subr.mxu0 0.0
    %267 = vmatpush2.xpose.msra.mxu0 0.0
    %268 = vmatprep.subr.mxu0 0.0
    %269 = vmatpush2.xpose.msra.mxu0 0.0
    %270 = vmatprep.subr.mxu0 0.0
    %271 = vmatpush2.xpose.msra.mxu0 0.0
    %272 = vmatprep.subr.mxu0 0.0
    %273 = vmatpush2.xpose.msra.mxu0 0.0
    %274 = vmatprep.subr.mxu0 0.0
    %275 = vmatpush2.xpose.msra.mxu0 0.0
    %276 = vmatprep.subr.mxu0 0.0
    %277 = vmatpush2.xpose.msra.mxu0 0.0
    %278 = vmatprep.mubr.f32.mxu0 0.0
    %279 = vmatmul.mubr.f32.gmra.mxu0 %v212
    %v280 = vpop.f32.mrf.mxu0
    %v281 = vadd.f32 0.0, %v280
    %v282 = vpop.f32.mrf.mxu0
    %283 = vdwg.mxu0
    %vm284 = vcmask 64512
    %v285 = vsel %vm284, %v208, -inf
    %286 = vmax.xlane.f32.xlu0 %v285
    %v287 = vpop.xlane.xlu0 %286
    %v288 = vsel %vm284, %v281, -inf
    %289 = vmax.xlane.f32.xlu0 %v288
    %v290 = vpop.xlane.xlu0 %289
    %v291 = vsub.f32 %v208, %v287
    %v292 = vsub.f32 %v281, %v290
    %v293 = vmul.f32 %v291, 1.442695
    %v294 = vpow.pop %v293
    %v295 = vmul.f32 %v292, 1.442695
    %v296 = vpow.pop %v295
    %v297 = vsel %vm284, %v294, 0.0
    %298 = vadd.xlane.f32.xlu0 %v297
    %v299 = vpop.xlane.xlu0 %298
    %v300 = vsel %vm284, %v296, 0.0
    %301 = vadd.xlane.f32.xlu0 %v300
    %v302 = vpop.xlane.xlu0 %301
    %v303 = vrcp.pop %v299
    %v304 = vrcp.pop %v302
    %v305 = vmul.f32 %v294, %v303
    %v306 = vmul.f32 %v296, %v304
    %v308 = vsel %vm284, %v305, 0
    %310 = vmatprep.subr.mxu0 0.0
    %311 = vmatpush1.msra.mxu0 0.0
    %312 = vmatprep.subr.mxu0 0.0
    %313 = vmatpush1.msra.mxu0 0.0
    %314 = vmatprep.subr.mxu0 0.0
    %315 = vmatpush1.msra.mxu0 0.0
    %316 = vmatprep.subr.mxu0 0.0
    %317 = vmatpush1.msra.mxu0 0.0
    %318 = vmatprep.subr.mxu0 0.0
    %319 = vmatpush1.msra.mxu0 0.0
    %320 = vmatprep.subr.mxu0 0.0
    %321 = vmatpush1.msra.mxu0 0.0
    %322 = vmatprep.subr.mxu0 0.0
    %323 = vmatpush1.msra.mxu0 0.0
    %324 = vmatprep.subr.mxu0 0.0
    %325 = vmatpush1.msra.mxu0 0.0
    %326 = vmatprep.subr.mxu0 0.0
    %327 = vmatpush1.msra.mxu0 0.0
    %328 = vmatprep.subr.mxu0 0.0
    %329 = vmatpush1.msra.mxu0 0.0
    %330 = vmatprep.subr.mxu0 0.0
    %331 = vmatpush1.msra.mxu0 0.0
    %332 = vmatprep.subr.mxu0 0.0
    %333 = vmatpush1.msra.mxu0 0.0
    %334 = vmatprep.subr.mxu0 0.0
    %335 = vmatpush1.msra.mxu0 0.0
    %336 = vmatprep.subr.mxu0 0.0
    %337 = vmatpush1.msra.mxu0 0.0
    %338 = vmatprep.subr.mxu0 0.0
    %339 = vmatpush1.msra.mxu0 0.0
    %340 = vmatprep.subr.mxu0 0.0
    %341 = vmatpush1.msra.mxu0 %v40
    %342 = vmatprep.subr.mxu0 0.0
    %343 = vmatpush2.msra.mxu0 0.0
    %344 = vmatprep.subr.mxu0 0.0
    %345 = vmatpush2.msra.mxu0 0.0
    %346 = vmatprep.subr.mxu0 0.0
    %347 = vmatpush2.msra.mxu0 0.0
    %348 = vmatprep.subr.mxu0 0.0
    %349 = vmatpush2.msra.mxu0 0.0
    %350 = vmatprep.subr.mxu0 0.0
    %351 = vmatpush2.msra.mxu0 0.0
    %352 = vmatprep.subr.mxu0 0.0
    %353 = vmatpush2.msra.mxu0 0.0
    %354 = vmatprep.subr.mxu0 0.0
    %355 = vmatpush2.msra.mxu0 0.0
    %356 = vmatprep.subr.mxu0 0.0
    %357 = vmatpush2.msra.mxu0 0.0
    %358 = vmatprep.subr.mxu0 0.0
    %359 = vmatpush2.msra.mxu0 0.0
    %360 = vmatprep.subr.mxu0 0.0
    %361 = vmatpush2.msra.mxu0 0.0
    %362 = vmatprep.subr.mxu0 0.0
    %363 = vmatpush2.msra.mxu0 0.0
    %364 = vmatprep.subr.mxu0 0.0
    %365 = vmatpush2.msra.mxu0 0.0
    %366 = vmatprep.subr.mxu0 0.0
    %367 = vmatpush2.msra.mxu0 0.0
    %368 = vmatprep.subr.mxu0 0.0
    %369 = vmatpush2.msra.mxu0 0.0
    %370 = vmatprep.subr.mxu0 0.0
    %371 = vmatpush2.msra.mxu0 0.0
    %372 = vmatprep.subr.mxu0 0.0
    %373 = vmatpush2.msra.mxu0 0.0
    %374 = vmatprep.mubr.f32.mxu0 0.0
    %375 = vmatmul.mubr.f32.gmra.mxu0 %v308
    %v376 = vpop.f32.mrf.mxu0
    %v377 = vadd.f32 0.0, %v376
    %v378 = vpop.f32.mrf.mxu0
    %379 = vdwg.mxu0
    %v381 = vsel %vm284, %v306, 0
    %383 = vmatprep.subr.mxu0 0.0
    %384 = vmatpush1.msra.mxu0 0.0
    %385 = vmatprep.subr.mxu0 0.0
    %386 = vmatpush1.msra.mxu0 0.0
    %387 = vmatprep.subr.mxu0 0.0
    %388 = vmatpush1.msra.mxu0 0.0
    %389 = vmatprep.subr.mxu0 0.0
    %390 = vmatpush1.msra.mxu0 0.0
    %391 = vmatprep.subr.mxu0 0.0
    %392 = vmatpush1.msra.mxu0 0.0
    %393 = vmatprep.subr.mxu0 0.0
    %394 = vmatpush1.msra.mxu0 0.0
    %395 = vmatprep.subr.mxu0 0.0
    %396 = vmatpush1.msra.mxu0 0.0
    %397 = vmatprep.subr.mxu0 0.0
    %398 = vmatpush1.msra.mxu0 0.0
    %399 = vmatprep.subr.mxu0 0.0
    %400 = vmatpush1.msra.mxu0 0.0
    %401 = vmatprep.subr.mxu0 0.0
    %402 = vmatpush1.msra.mxu0 0.0
    %403 = vmatprep.subr.mxu0 0.0
    %404 = vmatpush1.msra.mxu0 0.0
    %405 = vmatprep.subr.mxu0 0.0
    %406 = vmatpush1.msra.mxu0 0.0
    %407 = vmatprep.subr.mxu0 0.0
    %408 = vmatpush1.msra.mxu0 0.0
    %409 = vmatprep.subr.mxu0 0.0
    %410 = vmatpush1.msra.mxu0 0.0
    %411 = vmatprep.subr.mxu0 0.0
    %412 = vmatpush1.msra.mxu0 0.0
    %413 = vmatprep.subr.mxu0 0.0
    %414 = vmatpush1.msra.mxu0 %v41
    %415 = vmatprep.subr.mxu0 0.0
    %416 = vmatpush2.msra.mxu0 0.0
    %417 = vmatprep.subr.mxu0 0.0
    %418 = vmatpush2.msra.mxu0 0.0
    %419 = vmatprep.subr.mxu0 0.0
    %420 = vmatpush2.msra.mxu0 0.0
    %421 = vmatprep.subr.mxu0 0.0
    %422 = vmatpush2.msra.mxu0 0.0
    %423 = vmatprep.subr.mxu0 0.0
    %424 = vmatpush2.msra.mxu0 0.0
    %425 = vmatprep.subr.mxu0 0.0
    %426 = vmatpush2.msra.mxu0 0.0
    %427 = vmatprep.subr.mxu0 0.0
    %428 = vmatpush2.msra.mxu0 0.0
    %429 = vmatprep.subr.mxu0 0.0
    %430 = vmatpush2.msra.mxu0 0.0
    %431 = vmatprep.subr.mxu0 0.0
    %432 = vmatpush2.msra.mxu0 0.0
    %433 = vmatprep.subr.mxu0 0.0
    %434 = vmatpush2.msra.mxu0 0.0
    %435 = vmatprep.subr.mxu0 0.0
    %436 = vmatpush2.msra.mxu0 0.0
    %437 = vmatprep.subr.mxu0 0.0
    %438 = vmatpush2.msra.mxu0 0.0
    %439 = vmatprep.subr.mxu0 0.0
    %440 = vmatpush2.msra.mxu0 0.0
    %441 = vmatprep.subr.mxu0 0.0
    %442 = vmatpush2.msra.mxu0 0.0
    %443 = vmatprep.subr.mxu0 0.0
    %444 = vmatpush2.msra.mxu0 0.0
    %445 = vmatprep.subr.mxu0 0.0
    %446 = vmatpush2.msra.mxu0 0.0
    %447 = vmatprep.mubr.f32.mxu0 0.0
    %448 = vmatmul.mubr.f32.gmra.mxu0 %v381
    %v449 = vpop.f32.mrf.mxu0
    %v450 = vadd.f32 0.0, %v449
    %v451 = vpop.f32.mrf.mxu0
    %452 = vdwg.mxu0
    %453 = vmatprep.subr.mxu0 0.0
    %454 = vmatpush1.msra.mxu0 0.0
    %455 = vmatprep.subr.mxu0 0.0
    %456 = vmatpush1.msra.mxu0 0.0
    %457 = vmatprep.subr.mxu0 0.0
    %458 = vmatpush1.msra.mxu0 0.0
    %459 = vmatprep.subr.mxu0 0.0
    %460 = vmatpush1.msra.mxu0 0.0
    %461 = vmatprep.subr.mxu0 0.0
    %462 = vmatpush1.msra.mxu0 0.0
    %463 = vmatprep.subr.mxu0 0.0
    %464 = vmatpush1.msra.mxu0 0.0
    %465 = vmatprep.subr.mxu0 0.0
    %466 = vmatpush1.msra.mxu0 0.0
    %467 = vmatprep.subr.mxu0 0.0
    %468 = vmatpush1.msra.mxu0 0.0
    %469 = vmatprep.subr.mxu0 0.0
    %470 = vmatpush1.msra.mxu0 0.0
    %471 = vmatprep.subr.mxu0 0.0
    %472 = vmatpush1.msra.mxu0 0.0
    %473 = vmatprep.subr.mxu0 0.0
    %474 = vmatpush1.msra.mxu0 0.0
    %475 = vmatprep.subr.mxu0 0.0
    %476 = vmatpush1.msra.mxu0 0.0
    %477 = vmatprep.subr.mxu0 0.0
    %478 = vmatpush1.msra.mxu0 %v55
    %479 = vmatprep.subr.mxu0 0.0
    %480 = vmatpush1.msra.mxu0 %v54
    %481 = vmatprep.subr.mxu0 0.0
    %482 = vmatpush1.msra.mxu0 %v53
    %483 = vmatprep.subr.mxu0 0.0
    %484 = vmatpush1.msra.mxu0 %v52
    %485 = vmatprep.subr.mxu0 0.0
    %486 = vmatpush2.msra.mxu0 0.0
    %487 = vmatprep.subr.mxu0 0.0
    %488 = vmatpush2.msra.mxu0 0.0
    %489 = vmatprep.subr.mxu0 0.0
    %490 = vmatpush2.msra.mxu0 0.0
    %491 = vmatprep.subr.mxu0 0.0
    %492 = vmatpush2.msra.mxu0 0.0
    %493 = vmatprep.subr.mxu0 0.0
    %494 = vmatpush2.msra.mxu0 0.0
    %495 = vmatprep.subr.mxu0 0.0
    %496 = vmatpush2.msra.mxu0 0.0
    %497 = vmatprep.subr.mxu0 0.0
    %498 = vmatpush2.msra.mxu0 0.0
    %499 = vmatprep.subr.mxu0 0.0
    %500 = vmatpush2.msra.mxu0 0.0
    %501 = vmatprep.subr.mxu0 0.0
    %502 = vmatpush2.msra.mxu0 0.0
    %503 = vmatprep.subr.mxu0 0.0
    %504 = vmatpush2.msra.mxu0 0.0
    %505 = vmatprep.subr.mxu0 0.0
    %506 = vmatpush2.msra.mxu0 0.0
    %507 = vmatprep.subr.mxu0 0.0
    %508 = vmatpush2.msra.mxu0 0.0
    %509 = vmatprep.subr.mxu0 0.0
    %510 = vmatpush2.msra.mxu0 0.0
    %511 = vmatprep.subr.mxu0 0.0
    %512 = vmatpush2.msra.mxu0 0.0
    %513 = vmatprep.subr.mxu0 0.0
    %514 = vmatpush2.msra.mxu0 0.0
    %515 = vmatprep.subr.mxu0 0.0
    %516 = vmatpush2.msra.mxu0 0.0
    %517 = vmatprep.mubr.f32.mxu0 0.0
    %518 = vmatmul.mubr.f32.gmra.mxu0 %v139
    %v519 = vpop.f32.mrf.mxu0
    %v520 = vadd.f32 0.0, %v519
    %v521 = vpop.f32.mrf.mxu0
    %522 = vmatprep.mubr.f32.mxu0 0.0
    %523 = vmatmul.mubr.f32.gmra.mxu0 %v212
    %v524 = vpop.f32.mrf.mxu0
    %v525 = vadd.f32 0.0, %v524
    %v526 = vpop.f32.mrf.mxu0
    %527 = vdwg.mxu0
    %v529 = vsel %vm56, %v377, 0
    %v532 = vsel %vm56, %v450, 0
    %534 = vmatprep.subr.mxu0 0.0
    %535 = vmatpush1.msra.mxu0 0.0
    %536 = vmatprep.subr.mxu0 0.0
    %537 = vmatpush1.msra.mxu0 0.0
    %538 = vmatprep.subr.mxu0 0.0
    %539 = vmatpush1.msra.mxu0 0.0
    %540 = vmatprep.subr.mxu0 0.0
    %541 = vmatpush1.msra.mxu0 0.0
    %542 = vmatprep.subr.mxu0 0.0
    %543 = vmatpush1.msra.mxu0 0.0
    %544 = vmatprep.subr.mxu0 0.0
    %545 = vmatpush1.msra.mxu0 0.0
    %546 = vmatprep.subr.mxu0 0.0
    %547 = vmatpush1.msra.mxu0 0.0
    %548 = vmatprep.subr.mxu0 0.0
    %549 = vmatpush1.msra.mxu0 0.0
    %550 = vmatprep.subr.mxu0 0.0
    %551 = vmatpush1.msra.mxu0 0.0
    %552 = vmatprep.subr.mxu0 0.0
    %553 = vmatpush1.msra.mxu0 0.0
    %554 = vmatprep.subr.mxu0 0.0
    %555 = vmatpush1.msra.mxu0 0.0
    %556 = vmatprep.subr.mxu0 0.0
    %557 = vmatpush1.msra.mxu0 0.0
    %558 = vmatprep.subr.mxu0 0.0
    %559 = vmatpush1.msra.mxu0 %v50
    %560 = vmatprep.subr.mxu0 0.0
    %561 = vmatpush1.msra.mxu0 %v49
    %562 = vmatprep.subr.mxu0 0.0
    %563 = vmatpush1.msra.mxu0 %v48
    %564 = vmatprep.subr.mxu0 0.0
    %565 = vmatpush1.msra.mxu0 %v47
    %566 = vmatprep.subr.mxu0 0.0
    %567 = vmatpush2.msra.mxu0 0.0
    %568 = vmatprep.subr.mxu0 0.0
    %569 = vmatpush2.msra.mxu0 0.0
    %570 = vmatprep.subr.mxu0 0.0
    %571 = vmatpush2.msra.mxu0 0.0
    %572 = vmatprep.subr.mxu0 0.0
    %573 = vmatpush2.msra.mxu0 0.0
    %574 = vmatprep.subr.mxu0 0.0
    %575 = vmatpush2.msra.mxu0 0.0
    %576 = vmatprep.subr.mxu0 0.0
    %577 = vmatpush2.msra.mxu0 0.0
    %578 = vmatprep.subr.mxu0 0.0
    %579 = vmatpush2.msra.mxu0 0.0
    %580 = vmatprep.subr.mxu0 0.0
    %581 = vmatpush2.msra.mxu0 0.0
    %582 = vmatprep.subr.mxu0 0.0
    %583 = vmatpush2.msra.mxu0 0.0
    %584 = vmatprep.subr.mxu0 0.0
    %585 = vmatpush2.msra.mxu0 0.0
    %586 = vmatprep.subr.mxu0 0.0
    %587 = vmatpush2.msra.mxu0 0.0
    %588 = vmatprep.subr.mxu0 0.0
    %589 = vmatpush2.msra.mxu0 0.0
    %590 = vmatprep.subr.mxu0 0.0
    %591 = vmatpush2.msra.mxu0 0.0
    %592 = vmatprep.subr.mxu0 0.0
    %593 = vmatpush2.msra.mxu0 0.0
    %594 = vmatprep.subr.mxu0 0.0
    %595 = vmatpush2.msra.mxu0 0.0
    %596 = vmatprep.subr.mxu0 0.0
    %597 = vmatpush2.msra.mxu0 0.0
    %598 = vmatprep.mubr.f32.mxu0 0.0
    %599 = vmatmul.mubr.f32.gmra.mxu0 %v529
    %v600 = vpop.f32.mrf.mxu0
    %v601 = vadd.f32 %v520, %v600
    %v602 = vpop.f32.mrf.mxu0
    %603 = vmatprep.mubr.f32.mxu0 0.0
    %604 = vmatmul.mubr.f32.gmra.mxu0 %v532
    %v605 = vpop.f32.mrf.mxu0
    %v606 = vadd.f32 %v525, %v605
    %v607 = vpop.f32.mrf.mxu0
    %608 = vdwg.mxu0
    %v609 = vtanh.pop %v601
    %v610 = vtanh.pop %v606
    %s611 = scalar_lea.vmem [#allocation5], 96
    %v612 = vld [vmem:[%s611] sm:$0xff]
    %v613 = vld [vmem:[%s611 + $0x8] sm:$0xff]
    %v614 = vld [vmem:[%s611 + $0x10] sm:$0xff]
    %v615 = vld [vmem:[%s611 + $0x18] sm:$0xff]
    %s616 = scalar_lea.vmem [#allocation5], 128
    %v617 = vld [vmem:[%s616] sm:$0xff]
    %v618 = vld [vmem:[%s616 + $0x8] sm:$0xff]
    %v619 = vld [vmem:[%s616 + $0x10] sm:$0xff]
    %v620 = vld [vmem:[%s616 + $0x18] sm:$0xff]
    %s621 = scalar_lea.vmem [#allocation5], 160
    %v622 = vld [vmem:[%s621] sm:$0xff]
    %v623 = vld [vmem:[%s621 + $0x8] sm:$0xff]
    %v624 = vld [vmem:[%s621 + $0x10] sm:$0xff]
    %v625 = vld [vmem:[%s621 + $0x18] sm:$0xff]
    %v627 = vsel %vm56, %v609, 0
    %v630 = vsel %vm56, %v610, 0
    %632 = vmatprep.subr.mxu0 0.0
    %633 = vmatpush1.msra.mxu0 0.0
    %634 = vmatprep.subr.mxu0 0.0
    %635 = vmatpush1.msra.mxu0 0.0
    %636 = vmatprep.subr.mxu0 0.0
    %637 = vmatpush1.msra.mxu0 0.0
    %638 = vmatprep.subr.mxu0 0.0
    %639 = vmatpush1.msra.mxu0 0.0
    %640 = vmatprep.subr.mxu0 0.0
    %641 = vmatpush1.msra.mxu0 0.0
    %642 = vmatprep.subr.mxu0 0.0
    %643 = vmatpush1.msra.mxu0 0.0
    %644 = vmatprep.subr.mxu0 0.0
    %645 = vmatpush1.msra.mxu0 0.0
    %646 = vmatprep.subr.mxu0 0.0
    %647 = vmatpush1.msra.mxu0 0.0
    %648 = vmatprep.subr.mxu0 0.0
    %649 = vmatpush1.msra.mxu0 0.0
    %650 = vmatprep.subr.mxu0 0.0
    %651 = vmatpush1.msra.mxu0 0.0
    %652 = vmatprep.subr.mxu0 0.0
    %653 = vmatpush1.msra.mxu0 0.0
    %654 = vmatprep.subr.mxu0 0.0
    %655 = vmatpush1.msra.mxu0 0.0
    %656 = vmatprep.subr.mxu0 0.0
    %657 = vmatpush1.msra.mxu0 %v615
    %658 = vmatprep.subr.mxu0 0.0
    %659 = vmatpush1.msra.mxu0 %v614
    %660 = vmatprep.subr.mxu0 0.0
    %661 = vmatpush1.msra.mxu0 %v613
    %662 = vmatprep.subr.mxu0 0.0
    %663 = vmatpush1.msra.mxu0 %v612
    %664 = vmatprep.subr.mxu0 0.0
    %665 = vmatpush2.msra.mxu0 0.0
    %666 = vmatprep.subr.mxu0 0.0
    %667 = vmatpush2.msra.mxu0 0.0
    %668 = vmatprep.subr.mxu0 0.0
    %669 = vmatpush2.msra.mxu0 0.0
    %670 = vmatprep.subr.mxu0 0.0
    %671 = vmatpush2.msra.mxu0 0.0
    %672 = vmatprep.subr.mxu0 0.0
    %673 = vmatpush2.msra.mxu0 0.0
    %674 = vmatprep.subr.mxu0 0.0
    %675 = vmatpush2.msra.mxu0 0.0
    %676 = vmatprep.subr.mxu0 0.0
    %677 = vmatpush2.msra.mxu0 0.0
    %678 = vmatprep.subr.mxu0 0.0
    %679 = vmatpush2.msra.mxu0 0.0
    %680 = vmatprep.subr.mxu0 0.0
    %681 = vmatpush2.msra.mxu0 0.0
    %682 = vmatprep.subr.mxu0 0.0
    %683 = vmatpush2.msra.mxu0 0.0
    %684 = vmatprep.subr.mxu0 0.0
    %685 = vmatpush2.msra.mxu0 0.0
    %686 = vmatprep.subr.mxu0 0.0
    %687 = vmatpush2.msra.mxu0 0.0
    %688 = vmatprep.subr.mxu0 0.0
    %689 = vmatpush2.msra.mxu0 0.0
    %690 = vmatprep.subr.mxu0 0.0
    %691 = vmatpush2.msra.mxu0 0.0
    %692 = vmatprep.subr.mxu0 0.0
    %693 = vmatpush2.msra.mxu0 0.0
    %694 = vmatprep.subr.mxu0 0.0
    %695 = vmatpush2.msra.mxu0 0.0
    %696 = vmatprep.mubr.f32.mxu0 0.0
    %697 = vmatmul.mubr.f32.gmra.mxu0 %v627
    %v698 = vpop.f32.mrf.mxu0
    %v699 = vadd.f32 0.0, %v698
    %v700 = vpop.f32.mrf.mxu0
    %701 = vmatprep.mubr.f32.mxu0 0.0
    %702 = vmatmul.mubr.f32.gmra.mxu0 %v630
    %v703 = vpop.f32.mrf.mxu0
    %v704 = vadd.f32 0.0, %v703
    %v705 = vpop.f32.mrf.mxu0
    %706 = vdwg.mxu0
    %v708 = vsel %vm56, %v699, 0
    %710 = vmatprep.subr.mxu0 0.0
    %711 = vmatpush1.xpose.msra.mxu0 0.0
    %712 = vmatprep.subr.mxu0 0.0
    %713 = vmatpush1.xpose.msra.mxu0 0.0
    %714 = vmatprep.subr.mxu0 0.0
    %715 = vmatpush1.xpose.msra.mxu0 0.0
    %716 = vmatprep.subr.mxu0 0.0
    %717 = vmatpush1.xpose.msra.mxu0 0.0
    %718 = vmatprep.subr.mxu0 0.0
    %719 = vmatpush1.xpose.msra.mxu0 0.0
    %720 = vmatprep.subr.mxu0 0.0
    %721 = vmatpush1.xpose.msra.mxu0 0.0
    %722 = vmatprep.subr.mxu0 0.0
    %723 = vmatpush1.xpose.msra.mxu0 0.0
    %724 = vmatprep.subr.mxu0 0.0
    %725 = vmatpush1.xpose.msra.mxu0 0.0
    %726 = vmatprep.subr.mxu0 0.0
    %727 = vmatpush1.xpose.msra.mxu0 0.0
    %728 = vmatprep.subr.mxu0 0.0
    %729 = vmatpush1.xpose.msra.mxu0 0.0
    %730 = vmatprep.subr.mxu0 0.0
    %731 = vmatpush1.xpose.msra.mxu0 0.0
    %732 = vmatprep.subr.mxu0 0.0
    %733 = vmatpush1.xpose.msra.mxu0 0.0
    %734 = vmatprep.subr.mxu0 0.0
    %735 = vmatpush1.xpose.msra.mxu0 0.0
    %736 = vmatprep.subr.mxu0 0.0
    %737 = vmatpush1.xpose.msra.mxu0 0.0
    %738 = vmatprep.subr.mxu0 0.0
    %739 = vmatpush1.xpose.msra.mxu0 0.0
    %740 = vmatprep.subr.mxu0 0.0
    %741 = vmatpush1.xpose.msra.mxu0 %v627
    %742 = vmatprep.subr.mxu0 0.0
    %743 = vmatpush2.xpose.msra.mxu0 0.0
    %744 = vmatprep.subr.mxu0 0.0
    %745 = vmatpush2.xpose.msra.mxu0 0.0
    %746 = vmatprep.subr.mxu0 0.0
    %747 = vmatpush2.xpose.msra.mxu0 0.0
    %748 = vmatprep.subr.mxu0 0.0
    %749 = vmatpush2.xpose.msra.mxu0 0.0
    %750 = vmatprep.subr.mxu0 0.0
    %751 = vmatpush2.xpose.msra.mxu0 0.0
    %752 = vmatprep.subr.mxu0 0.0
    %753 = vmatpush2.xpose.msra.mxu0 0.0
    %754 = vmatprep.subr.mxu0 0.0
    %755 = vmatpush2.xpose.msra.mxu0 0.0
    %756 = vmatprep.subr.mxu0 0.0
    %757 = vmatpush2.xpose.msra.mxu0 0.0
    %758 = vmatprep.subr.mxu0 0.0
    %759 = vmatpush2.xpose.msra.mxu0 0.0
    %760 = vmatprep.subr.mxu0 0.0
    %761 = vmatpush2.xpose.msra.mxu0 0.0
    %762 = vmatprep.subr.mxu0 0.0
    %763 = vmatpush2.xpose.msra.mxu0 0.0
    %764 = vmatprep.subr.mxu0 0.0
    %765 = vmatpush2.xpose.msra.mxu0 0.0
    %766 = vmatprep.subr.mxu0 0.0
    %767 = vmatpush2.xpose.msra.mxu0 0.0
    %768 = vmatprep.subr.mxu0 0.0
    %769 = vmatpush2.xpose.msra.mxu0 0.0
    %770 = vmatprep.subr.mxu0 0.0
    %771 = vmatpush2.xpose.msra.mxu0 0.0
    %772 = vmatprep.subr.mxu0 0.0
    %773 = vmatpush2.xpose.msra.mxu0 0.0
    %774 = vmatprep.mubr.f32.mxu0 0.0
    %775 = vmatmul.mubr.f32.gmra.mxu0 %v708
    %v776 = vpop.f32.mrf.mxu0
    %v777 = vadd.f32 0.0, %v776
    %v778 = vpop.f32.mrf.mxu0
    %779 = vdwg.mxu0
    %v781 = vsel %vm56, %v704, 0
    %783 = vmatprep.subr.mxu0 0.0
    %784 = vmatpush1.xpose.msra.mxu0 0.0
    %785 = vmatprep.subr.mxu0 0.0
    %786 = vmatpush1.xpose.msra.mxu0 0.0
    %787 = vmatprep.subr.mxu0 0.0
    %788 = vmatpush1.xpose.msra.mxu0 0.0
    %789 = vmatprep.subr.mxu0 0.0
    %790 = vmatpush1.xpose.msra.mxu0 0.0
    %791 = vmatprep.subr.mxu0 0.0
    %792 = vmatpush1.xpose.msra.mxu0 0.0
    %793 = vmatprep.subr.mxu0 0.0
    %794 = vmatpush1.xpose.msra.mxu0 0.0
    %795 = vmatprep.subr.mxu0 0.0
    %796 = vmatpush1.xpose.msra.mxu0 0.0
    %797 = vmatprep.subr.mxu0 0.0
    %798 = vmatpush1.xpose.msra.mxu0 0.0
    %799 = vmatprep.subr.mxu0 0.0
    %800 = vmatpush1.xpose.msra.mxu0 0.0
    %801 = vmatprep.subr.mxu0 0.0
    %802 = vmatpush1.xpose.msra.mxu0 0.0
    %803 = vmatprep.subr.mxu0 0.0
    %804 = vmatpush1.xpose.msra.mxu0 0.0
    %805 = vmatprep.subr.mxu0 0.0
    %806 = vmatpush1.xpose.msra.mxu0 0.0
    %807 = vmatprep.subr.mxu0 0.0
    %808 = vmatpush1.xpose.msra.mxu0 0.0
    %809 = vmatprep.subr.mxu0 0.0
    %810 = vmatpush1.xpose.msra.mxu0 0.0
    %811 = vmatprep.subr.mxu0 0.0
    %812 = vmatpush1.xpose.msra.mxu0 0.0
    %813 = vmatprep.subr.mxu0 0.0
    %814 = vmatpush1.xpose.msra.mxu0 %v630
    %815 = vmatprep.subr.mxu0 0.0
    %816 = vmatpush2.xpose.msra.mxu0 0.0
    %817 = vmatprep.subr.mxu0 0.0
    %818 = vmatpush2.xpose.msra.mxu0 0.0
    %819 = vmatprep.subr.mxu0 0.0
    %820 = vmatpush2.xpose.msra.mxu0 0.0
    %821 = vmatprep.subr.mxu0 0.0
    %822 = vmatpush2.xpose.msra.mxu0 0.0
    %823 = vmatprep.subr.mxu0 0.0
    %824 = vmatpush2.xpose.msra.mxu0 0.0
    %825 = vmatprep.subr.mxu0 0.0
    %826 = vmatpush2.xpose.msra.mxu0 0.0
    %827 = vmatprep.subr.mxu0 0.0
    %828 = vmatpush2.xpose.msra.mxu0 0.0
    %829 = vmatprep.subr.mxu0 0.0
    %830 = vmatpush2.xpose.msra.mxu0 0.0
    %831 = vmatprep.subr.mxu0 0.0
    %832 = vmatpush2.xpose.msra.mxu0 0.0
    %833 = vmatprep.subr.mxu0 0.0
    %834 = vmatpush2.xpose.msra.mxu0 0.0
    %835 = vmatprep.subr.mxu0 0.0
    %836 = vmatpush2.xpose.msra.mxu0 0.0
    %837 = vmatprep.subr.mxu0 0.0
    %838 = vmatpush2.xpose.msra.mxu0 0.0
    %839 = vmatprep.subr.mxu0 0.0
    %840 = vmatpush2.xpose.msra.mxu0 0.0
    %841 = vmatprep.subr.mxu0 0.0
    %842 = vmatpush2.xpose.msra.mxu0 0.0
    %843 = vmatprep.subr.mxu0 0.0
    %844 = vmatpush2.xpose.msra.mxu0 0.0
    %845 = vmatprep.subr.mxu0 0.0
    %846 = vmatpush2.xpose.msra.mxu0 0.0
    %847 = vmatprep.mubr.f32.mxu0 0.0
    %848 = vmatmul.mubr.f32.gmra.mxu0 %v781
    %v849 = vpop.f32.mrf.mxu0
    %v850 = vadd.f32 0.0, %v849
    %v851 = vpop.f32.mrf.mxu0
    %852 = vdwg.mxu0
    %v853 = vsel %vm284, %v777, -inf
    %854 = vmax.xlane.f32.xlu0 %v853
    %v855 = vpop.xlane.xlu0 %854
    %v856 = vsel %vm284, %v850, -inf
    %857 = vmax.xlane.f32.xlu0 %v856
    %v858 = vpop.xlane.xlu0 %857
    %v859 = vsub.f32 %v777, %v855
    %v860 = vsub.f32 %v850, %v858
    %v861 = vmul.f32 %v859, 1.442695
    %v862 = vpow.pop %v861
    %v863 = vmul.f32 %v860, 1.442695
    %v864 = vpow.pop %v863
    %v865 = vsel %vm284, %v862, 0.0
    %866 = vadd.xlane.f32.xlu0 %v865
    %v867 = vpop.xlane.xlu0 %866
    %v868 = vsel %vm284, %v864, 0.0
    %869 = vadd.xlane.f32.xlu0 %v868
    %v870 = vpop.xlane.xlu0 %869
    %v871 = vrcp.pop %v867
    %v872 = vrcp.pop %v870
    %v873 = vmul.f32 %v862, %v871
    %v874 = vmul.f32 %v864, %v872
    %v876 = vsel %vm284, %v873, 0
    %878 = vmatprep.subr.mxu0 0.0
    %879 = vmatpush1.msra.mxu0 0.0
    %880 = vmatprep.subr.mxu0 0.0
    %881 = vmatpush1.msra.mxu0 0.0
    %882 = vmatprep.subr.mxu0 0.0
    %883 = vmatpush1.msra.mxu0 0.0
    %884 = vmatprep.subr.mxu0 0.0
    %885 = vmatpush1.msra.mxu0 0.0
    %886 = vmatprep.subr.mxu0 0.0
    %887 = vmatpush1.msra.mxu0 0.0
    %888 = vmatprep.subr.mxu0 0.0
    %889 = vmatpush1.msra.mxu0 0.0
    %890 = vmatprep.subr.mxu0 0.0
    %891 = vmatpush1.msra.mxu0 0.0
    %892 = vmatprep.subr.mxu0 0.0
    %893 = vmatpush1.msra.mxu0 0.0
    %894 = vmatprep.subr.mxu0 0.0
    %895 = vmatpush1.msra.mxu0 0.0
    %896 = vmatprep.subr.mxu0 0.0
    %897 = vmatpush1.msra.mxu0 0.0
    %898 = vmatprep.subr.mxu0 0.0
    %899 = vmatpush1.msra.mxu0 0.0
    %900 = vmatprep.subr.mxu0 0.0
    %901 = vmatpush1.msra.mxu0 0.0
    %902 = vmatprep.subr.mxu0 0.0
    %903 = vmatpush1.msra.mxu0 0.0
    %904 = vmatprep.subr.mxu0 0.0
    %905 = vmatpush1.msra.mxu0 0.0
    %906 = vmatprep.subr.mxu0 0.0
    %907 = vmatpush1.msra.mxu0 0.0
    %908 = vmatprep.subr.mxu0 0.0
    %909 = vmatpush1.msra.mxu0 %v609
    %910 = vmatprep.subr.mxu0 0.0
    %911 = vmatpush2.msra.mxu0 0.0
    %912 = vmatprep.subr.mxu0 0.0
    %913 = vmatpush2.msra.mxu0 0.0
    %914 = vmatprep.subr.mxu0 0.0
    %915 = vmatpush2.msra.mxu0 0.0
    %916 = vmatprep.subr.mxu0 0.0
    %917 = vmatpush2.msra.mxu0 0.0
    %918 = vmatprep.subr.mxu0 0.0
    %919 = vmatpush2.msra.mxu0 0.0
    %920 = vmatprep.subr.mxu0 0.0
    %921 = vmatpush2.msra.mxu0 0.0
    %922 = vmatprep.subr.mxu0 0.0
    %923 = vmatpush2.msra.mxu0 0.0
    %924 = vmatprep.subr.mxu0 0.0
    %925 = vmatpush2.msra.mxu0 0.0
    %926 = vmatprep.subr.mxu0 0.0
    %927 = vmatpush2.msra.mxu0 0.0
    %928 = vmatprep.subr.mxu0 0.0
    %929 = vmatpush2.msra.mxu0 0.0
    %930 = vmatprep.subr.mxu0 0.0
    %931 = vmatpush2.msra.mxu0 0.0
    %932 = vmatprep.subr.mxu0 0.0
    %933 = vmatpush2.msra.mxu0 0.0
    %934 = vmatprep.subr.mxu0 0.0
    %935 = vmatpush2.msra.mxu0 0.0
    %936 = vmatprep.subr.mxu0 0.0
    %937 = vmatpush2.msra.mxu0 0.0
    %938 = vmatprep.subr.mxu0 0.0
    %939 = vmatpush2.msra.mxu0 0.0
    %940 = vmatprep.subr.mxu0 0.0
    %941 = vmatpush2.msra.mxu0 0.0
    %942 = vmatprep.mubr.f32.mxu0 0.0
    %943 = vmatmul.mubr.f32.gmra.mxu0 %v876
    %v944 = vpop.f32.mrf.mxu0
    %v945 = vadd.f32 0.0, %v944
    %v946 = vpop.f32.mrf.mxu0
    %947 = vdwg.mxu0
    %v949 = vsel %vm284, %v874, 0
    %951 = vmatprep.subr.mxu0 0.0
    %952 = vmatpush1.msra.mxu0 0.0
    %953 = vmatprep.subr.mxu0 0.0
    %954 = vmatpush1.msra.mxu0 0.0
    %955 = vmatprep.subr.mxu0 0.0
    %956 = vmatpush1.msra.mxu0 0.0
    %957 = vmatprep.subr.mxu0 0.0
    %958 = vmatpush1.msra.mxu0 0.0
    %959 = vmatprep.subr.mxu0 0.0
    %960 = vmatpush1.msra.mxu0 0.0
    %961 = vmatprep.subr.mxu0 0.0
    %962 = vmatpush1.msra.mxu0 0.0
    %963 = vmatprep.subr.mxu0 0.0
    %964 = vmatpush1.msra.mxu0 0.0
    %965 = vmatprep.subr.mxu0 0.0
    %966 = vmatpush1.msra.mxu0 0.0
    %967 = vmatprep.subr.mxu0 0.0
    %968 = vmatpush1.msra.mxu0 0.0
    %969 = vmatprep.subr.mxu0 0.0
    %970 = vmatpush1.msra.mxu0 0.0
    %971 = vmatprep.subr.mxu0 0.0
    %972 = vmatpush1.msra.mxu0 0.0
    %973 = vmatprep.subr.mxu0 0.0
    %974 = vmatpush1.msra.mxu0 0.0
    %975 = vmatprep.subr.mxu0 0.0
    %976 = vmatpush1.msra.mxu0 0.0
    %977 = vmatprep.subr.mxu0 0.0
    %978 = vmatpush1.msra.mxu0 0.0
    %979 = vmatprep.subr.mxu0 0.0
    %980 = vmatpush1.msra.mxu0 0.0
    %981 = vmatprep.subr.mxu0 0.0
    %982 = vmatpush1.msra.mxu0 %v610
    %983 = vmatprep.subr.mxu0 0.0
    %984 = vmatpush2.msra.mxu0 0.0
    %985 = vmatprep.subr.mxu0 0.0
    %986 = vmatpush2.msra.mxu0 0.0
    %987 = vmatprep.subr.mxu0 0.0
    %988 = vmatpush2.msra.mxu0 0.0
    %989 = vmatprep.subr.mxu0 0.0
    %990 = vmatpush2.msra.mxu0 0.0
    %991 = vmatprep.subr.mxu0 0.0
    %992 = vmatpush2.msra.mxu0 0.0
    %993 = vmatprep.subr.mxu0 0.0
    %994 = vmatpush2.msra.mxu0 0.0
    %995 = vmatprep.subr.mxu0 0.0
    %996 = vmatpush2.msra.mxu0 0.0
    %997 = vmatprep.subr.mxu0 0.0
    %998 = vmatpush2.msra.mxu0 0.0
    %999 = vmatprep.subr.mxu0 0.0
    %1000 = vmatpush2.msra.mxu0 0.0
    %1001 = vmatprep.subr.mxu0 0.0
    %1002 = vmatpush2.msra.mxu0 0.0
    %1003 = vmatprep.subr.mxu0 0.0
    %1004 = vmatpush2.msra.mxu0 0.0
    %1005 = vmatprep.subr.mxu0 0.0
    %1006 = vmatpush2.msra.mxu0 0.0
    %1007 = vmatprep.subr.mxu0 0.0
    %1008 = vmatpush2.msra.mxu0 0.0
    %1009 = vmatprep.subr.mxu0 0.0
    %1010 = vmatpush2.msra.mxu0 0.0
    %1011 = vmatprep.subr.mxu0 0.0
    %1012 = vmatpush2.msra.mxu0 0.0
    %1013 = vmatprep.subr.mxu0 0.0
    %1014 = vmatpush2.msra.mxu0 0.0
    %1015 = vmatprep.mubr.f32.mxu0 0.0
    %1016 = vmatmul.mubr.f32.gmra.mxu0 %v949
    %v1017 = vpop.f32.mrf.mxu0
    %v1018 = vadd.f32 0.0, %v1017
    %v1019 = vpop.f32.mrf.mxu0
    %1020 = vdwg.mxu0
    %1021 = vmatprep.subr.mxu0 0.0
    %1022 = vmatpush1.msra.mxu0 0.0
    %1023 = vmatprep.subr.mxu0 0.0
    %1024 = vmatpush1.msra.mxu0 0.0
    %1025 = vmatprep.subr.mxu0 0.0
    %1026 = vmatpush1.msra.mxu0 0.0
    %1027 = vmatprep.subr.mxu0 0.0
    %1028 = vmatpush1.msra.mxu0 0.0
    %1029 = vmatprep.subr.mxu0 0.0
    %1030 = vmatpush1.msra.mxu0 0.0
    %1031 = vmatprep.subr.mxu0 0.0
    %1032 = vmatpush1.msra.mxu0 0.0
    %1033 = vmatprep.subr.mxu0 0.0
    %1034 = vmatpush1.msra.mxu0 0.0
    %1035 = vmatprep.subr.mxu0 0.0
    %1036 = vmatpush1.msra.mxu0 0.0
    %1037 = vmatprep.subr.mxu0 0.0
    %1038 = vmatpush1.msra.mxu0 0.0
    %1039 = vmatprep.subr.mxu0 0.0
    %1040 = vmatpush1.msra.mxu0 0.0
    %1041 = vmatprep.subr.mxu0 0.0
    %1042 = vmatpush1.msra.mxu0 0.0
    %1043 = vmatprep.subr.mxu0 0.0
    %1044 = vmatpush1.msra.mxu0 0.0
    %1045 = vmatprep.subr.mxu0 0.0
    %1046 = vmatpush1.msra.mxu0 %v625
    %1047 = vmatprep.subr.mxu0 0.0
    %1048 = vmatpush1.msra.mxu0 %v624
    %1049 = vmatprep.subr.mxu0 0.0
    %1050 = vmatpush1.msra.mxu0 %v623
    %1051 = vmatprep.subr.mxu0 0.0
    %1052 = vmatpush1.msra.mxu0 %v622
    %1053 = vmatprep.subr.mxu0 0.0
    %1054 = vmatpush2.msra.mxu0 0.0
    %1055 = vmatprep.subr.mxu0 0.0
    %1056 = vmatpush2.msra.mxu0 0.0
    %1057 = vmatprep.subr.mxu0 0.0
    %1058 = vmatpush2.msra.mxu0 0.0
    %1059 = vmatprep.subr.mxu0 0.0
    %1060 = vmatpush2.msra.mxu0 0.0
    %1061 = vmatprep.subr.mxu0 0.0
    %1062 = vmatpush2.msra.mxu0 0.0
    %1063 = vmatprep.subr.mxu0 0.0
    %1064 = vmatpush2.msra.mxu0 0.0
    %1065 = vmatprep.subr.mxu0 0.0
    %1066 = vmatpush2.msra.mxu0 0.0
    %1067 = vmatprep.subr.mxu0 0.0
    %1068 = vmatpush2.msra.mxu0 0.0
    %1069 = vmatprep.subr.mxu0 0.0
    %1070 = vmatpush2.msra.mxu0 0.0
    %1071 = vmatprep.subr.mxu0 0.0
    %1072 = vmatpush2.msra.mxu0 0.0
    %1073 = vmatprep.subr.mxu0 0.0
    %1074 = vmatpush2.msra.mxu0 0.0
    %1075 = vmatprep.subr.mxu0 0.0
    %1076 = vmatpush2.msra.mxu0 0.0
    %1077 = vmatprep.subr.mxu0 0.0
    %1078 = vmatpush2.msra.mxu0 0.0
    %1079 = vmatprep.subr.mxu0 0.0
    %1080 = vmatpush2.msra.mxu0 0.0
    %1081 = vmatprep.subr.mxu0 0.0
    %1082 = vmatpush2.msra.mxu0 0.0
    %1083 = vmatprep.subr.mxu0 0.0
    %1084 = vmatpush2.msra.mxu0 0.0
    %1085 = vmatprep.mubr.f32.mxu0 0.0
    %1086 = vmatmul.mubr.f32.gmra.mxu0 %v708
    %v1087 = vpop.f32.mrf.mxu0
    %v1088 = vadd.f32 0.0, %v1087
    %v1089 = vpop.f32.mrf.mxu0
    %1090 = vmatprep.mubr.f32.mxu0 0.0
    %1091 = vmatmul.mubr.f32.gmra.mxu0 %v781
    %v1092 = vpop.f32.mrf.mxu0
    %v1093 = vadd.f32 0.0, %v1092
    %v1094 = vpop.f32.mrf.mxu0
    %1095 = vdwg.mxu0
    %v1097 = vsel %vm56, %v945, 0
    %v1100 = vsel %vm56, %v1018, 0
    %1102 = vmatprep.subr.mxu0 0.0
    %1103 = vmatpush1.msra.mxu0 0.0
    %1104 = vmatprep.subr.mxu0 0.0
    %1105 = vmatpush1.msra.mxu0 0.0
    %1106 = vmatprep.subr.mxu0 0.0
    %1107 = vmatpush1.msra.mxu0 0.0
    %1108 = vmatprep.subr.mxu0 0.0
    %1109 = vmatpush1.msra.mxu0 0.0
    %1110 = vmatprep.subr.mxu0 0.0
    %1111 = vmatpush1.msra.mxu0 0.0
    %1112 = vmatprep.subr.mxu0 0.0
    %1113 = vmatpush1.msra.mxu0 0.0
    %1114 = vmatprep.subr.mxu0 0.0
    %1115 = vmatpush1.msra.mxu0 0.0
    %1116 = vmatprep.subr.mxu0 0.0
    %1117 = vmatpush1.msra.mxu0 0.0
    %1118 = vmatprep.subr.mxu0 0.0
    %1119 = vmatpush1.msra.mxu0 0.0
    %1120 = vmatprep.subr.mxu0 0.0
    %1121 = vmatpush1.msra.mxu0 0.0
    %1122 = vmatprep.subr.mxu0 0.0
    %1123 = vmatpush1.msra.mxu0 0.0
    %1124 = vmatprep.subr.mxu0 0.0
    %1125 = vmatpush1.msra.mxu0 0.0
    %1126 = vmatprep.subr.mxu0 0.0
    %1127 = vmatpush1.msra.mxu0 %v620
    %1128 = vmatprep.subr.mxu0 0.0
    %1129 = vmatpush1.msra.mxu0 %v619
    %1130 = vmatprep.subr.mxu0 0.0
    %1131 = vmatpush1.msra.mxu0 %v618
    %1132 = vmatprep.subr.mxu0 0.0
    %1133 = vmatpush1.msra.mxu0 %v617
    %1134 = vmatprep.subr.mxu0 0.0
    %1135 = vmatpush2.msra.mxu0 0.0
    %1136 = vmatprep.subr.mxu0 0.0
    %1137 = vmatpush2.msra.mxu0 0.0
    %1138 = vmatprep.subr.mxu0 0.0
    %1139 = vmatpush2.msra.mxu0 0.0
    %1140 = vmatprep.subr.mxu0 0.0
    %1141 = vmatpush2.msra.mxu0 0.0
    %1142 = vmatprep.subr.mxu0 0.0
    %1143 = vmatpush2.msra.mxu0 0.0
    %1144 = vmatprep.subr.mxu0 0.0
    %1145 = vmatpush2.msra.mxu0 0.0
    %1146 = vmatprep.subr.mxu0 0.0
    %1147 = vmatpush2.msra.mxu0 0.0
    %1148 = vmatprep.subr.mxu0 0.0
    %1149 = vmatpush2.msra.mxu0 0.0
    %1150 = vmatprep.subr.mxu0 0.0
    %1151 = vmatpush2.msra.mxu0 0.0
    %1152 = vmatprep.subr.mxu0 0.0
    %1153 = vmatpush2.msra.mxu0 0.0
    %1154 = vmatprep.subr.mxu0 0.0
    %1155 = vmatpush2.msra.mxu0 0.0
    %1156 = vmatprep.subr.mxu0 0.0
    %1157 = vmatpush2.msra.mxu0 0.0
    %1158 = vmatprep.subr.mxu0 0.0
    %1159 = vmatpush2.msra.mxu0 0.0
    %1160 = vmatprep.subr.mxu0 0.0
    %1161 = vmatpush2.msra.mxu0 0.0
    %1162 = vmatprep.subr.mxu0 0.0
    %1163 = vmatpush2.msra.mxu0 0.0
    %1164 = vmatprep.subr.mxu0 0.0
    %1165 = vmatpush2.msra.mxu0 0.0
    %1166 = vmatprep.mubr.f32.mxu0 0.0
    %1167 = vmatmul.mubr.f32.gmra.mxu0 %v1097
    %v1168 = vpop.f32.mrf.mxu0
    %v1169 = vadd.f32 %v1088, %v1168
    %v1170 = vpop.f32.mrf.mxu0
    %1171 = vmatprep.mubr.f32.mxu0 0.0
    %1172 = vmatmul.mubr.f32.gmra.mxu0 %v1100
    %v1173 = vpop.f32.mrf.mxu0
    %v1174 = vadd.f32 %v1093, %v1173
    %v1175 = vpop.f32.mrf.mxu0
    %1176 = vdwg.mxu0
    %v1177 = vsel %vm56, %v1169, 0.0
    %v1178 = vrot.slane %v1177, 4
    %v1179 = vadd.f32 %v1177, %v1178
    %v1180 = vrot.slane %v1179, 2
    %v1181 = vadd.f32 %v1179, %v1180
    %v1182 = vrot.slane %v1181, 1
    %v1183 = vadd.f32 %v1181, %v1182
    %v1184 = vsel %vm56, %v1174, 0.0
    %v1185 = vrot.slane %v1184, 4
    %v1186 = vadd.f32 %v1184, %v1185
    %v1187 = vrot.slane %v1186, 2
    %v1188 = vadd.f32 %v1186, %v1187
    %v1189 = vrot.slane %v1188, 1
    %v1190 = vadd.f32 %v1188, %v1189
    %v1191 = vrcp.pop 8.0
    %v1192 = vmul.f32 %v1183, %v1191
    %v1193 = vmul.f32 %v1190, %v1191
    %vm1196 = vcmask 1041409
    %v1197 = vsel %vm1196, %v1193, %v1192
    %vm1199 = vcmask 254976
    %1200 = vst.msk [vmem:[#allocation7] sm:$0x3] %vm1199, %v1197
    // Predicated region
    $region18: #{tpu_custom_call.1} parent=1 // pred_check
      _
    $region19: #{tpu_custom_call.1} parent=1 // pred_check_branch
      %1202 = sbr.rel (0) target = $region21
    $region20: #{tpu_custom_call.1} parent=1 // pred_region
      %s1204 = ssub.s32 32, 32
      %1205 = vsyncadd [#allocation4], %s1204
      %s1207 = sshll.u32 [#allocation7], 4
      %s1208 = int_to_ptr.vmem [resolvable:$true] %s1207
      %1210 = dma.vmem_to_hbm [thread:$0]  %s1208, 32, %s2, [#allocation4]
    $region21: #{tpu_custom_call.1} parent=1 // pred_fallthru
      _
    // Predicated region
    $region22: #{tpu_custom_call.1} parent=1 // pred_check
      _
    $region23: #{tpu_custom_call.1} parent=1 // pred_check_branch
      %1212 = sbr.rel (0) target = $region25
    $region24: #{tpu_custom_call.1} parent=1 // pred_region
      %1213 = dma.done [#allocation4], 32
    $region25: #{tpu_custom_call.1} parent=1 // pred_fallthru
      _
    %1214 = vsyncpa [#allocation3], 1
    %1215 = vsyncpa [#allocation6], 1
    %1216 = vsyncpa [#allocation4], 1

</llo_original>
